<compile_context>
chip_gen: v7x
topology: tpu7x:2x2x1
jax: 0.10.0
libtpu: 0.0.40
codegen_flags: <defaults>
</compile_context>

<pallas_src>
import functools

import jax
import jax.numpy as jnp
from jax import lax
from jax.experimental import pallas as pl
from jax.experimental.pallas import tpu as pltpu


def _round_up(x, m):
    return (x + m - 1) // m * m


def make_rnn_kernel(T, B_pad, hidden_depth):
    """Builds the fused multi-layer RNN(relu) + Linear kernel.

    Ref layout (positional):
      refs[0]                      : x       (T*B_pad, E_pad)  time-major, flat
      refs[1 + 3*l .. 3 + 3*l]     : wih_l (in_pad, H_pad), whh_l (H_pad, H_pad),
                                     bias_l (1, H_pad)   [= b_ih + b_hh]
      refs[1 + 3*L]                : w2      (H_pad, O_pad)
      refs[2 + 3*L]                : b2      (1, O_pad)
      refs[3 + 3*L]                : out     (B_pad, O_pad)            (output)
      refs[4 + 3*L]                : xw      (T*B_pad, H_pad)  VMEM scratch
      refs[5 + 3*L] (depth > 1)    : hseq    (T*B_pad, H_pad)  VMEM scratch
    """

    def kernel(*refs):
        x_ref = refs[0]
        layer_refs = refs[1:1 + 3 * hidden_depth]
        w2_ref = refs[1 + 3 * hidden_depth]
        b2_ref = refs[2 + 3 * hidden_depth]
        out_ref = refs[3 + 3 * hidden_depth]
        xw_ref = refs[4 + 3 * hidden_depth]
        hseq_ref = refs[5 + 3 * hidden_depth] if hidden_depth > 1 else None

        H_pad = w2_ref.shape[0]

        h_last = None
        for layer in range(hidden_depth):
            wih_ref = layer_refs[3 * layer + 0]
            whh_ref = layer_refs[3 * layer + 1]
            bias_ref = layer_refs[3 * layer + 2]

            src_ref = x_ref if layer == 0 else hseq_ref

            # Hoisted input projection: ONE (T*B_pad, in) @ (in, H_pad) matmul
            # + bias, instead of T tiny per-step matmuls on the critical path.
            xw_ref[...] = (
                jnp.dot(src_ref[...], wih_ref[...],
                        preferred_element_type=jnp.float32)
                + bias_ref[...])

            whh = whh_ref[...]                       # loaded once per layer
            write_hseq = layer < hidden_depth - 1    # skip dead writes

            def step(t, h, _write=write_hseq):
                row = t * B_pad
                pre = xw_ref[pl.ds(row, B_pad), :] + jnp.dot(
                    h, whh, preferred_element_type=jnp.float32)
                h_new = jnp.maximum(pre, 0.0)
                if _write:
                    # (B_pad, H_pad) = (8, 128k) slab -> unmasked full stores.
                    hseq_ref[pl.ds(row, B_pad), :] = h_new
                return h_new

            h0 = jnp.zeros((B_pad, H_pad), jnp.float32)
            # Fully unrolled: gives the scheduler visibility across timesteps.
            h_last = lax.fori_loop(0, T, step, h0, unroll=True)

        # Final Linear on the last hidden state only (computed once).
        out_ref[...] = (
            jnp.dot(h_last, w2_ref[...], preferred_element_type=jnp.float32)
            + b2_ref[...])

    return kernel


@functools.partial(jax.jit, static_argnames=("hidden_depth",))
def recurrent_crossword_forward(encoded_clue, params, hidden_depth=1):
    """Pallas-backed forward. encoded_clue: (B, T) int32 -> (B, O) f32."""
    C = params["C"]
    B, T = encoded_clue.shape
    E = C.shape[1]
    H = params["rnn"][0]["weight_hh"].shape[0]
    O = params["W2_w"].shape[0]

    B_pad = _round_up(B, 8)        # f32 sublane
    E_pad = _round_up(E, 128)      # lanes
    H_pad = _round_up(H, 128)
    O_pad = _round_up(O, 128)

    # Embedding gather (plain-JAX glue), then time-major, padded, flattened.
    emb = jnp.take(C, encoded_clue, axis=0).astype(jnp.float32)   # (B, T, E)
    x = jnp.transpose(emb, (1, 0, 2))                             # (T, B, E)
    x = jnp.pad(x, ((0, 0), (0, B_pad - B), (0, E_pad - E)))
    x = x.reshape(T * B_pad, E_pad)

    operands = [x]
    for layer in range(hidden_depth):
        p = params["rnn"][layer]
        in_dim = E if layer == 0 else H
        in_pad = E_pad if layer == 0 else H_pad
        wih_t = jnp.pad(p["weight_ih"].T.astype(jnp.float32),
                        ((0, in_pad - in_dim), (0, H_pad - H)))
        whh_t = jnp.pad(p["weight_hh"].T.astype(jnp.float32),
                        ((0, H_pad - H), (0, H_pad - H)))
        bias = jnp.pad((p["bias_ih"] + p["bias_hh"]).astype(jnp.float32),
                       (0, H_pad - H)).reshape(1, H_pad)
        operands += [wih_t, whh_t, bias]

    w2_t = jnp.pad(params["W2_w"].T.astype(jnp.float32),
                   ((0, H_pad - H), (0, O_pad - O)))
    b2 = jnp.pad(params["W2_b"].astype(jnp.float32),
                 (0, O_pad - O)).reshape(1, O_pad)
    operands += [w2_t, b2]

    scratch_shapes = [pltpu.VMEM((T * B_pad, H_pad), jnp.float32)]   # xw
    if hidden_depth > 1:
        scratch_shapes.append(
            pltpu.VMEM((T * B_pad, H_pad), jnp.float32))             # hseq

    vmem_spec = pl.BlockSpec(memory_space=pltpu.MemorySpace.VMEM)
    out_pad = pl.pallas_call(
        make_rnn_kernel(T, B_pad, hidden_depth),
        out_shape=jax.ShapeDtypeStruct((B_pad, O_pad), jnp.float32),
        in_specs=[vmem_spec] * len(operands),
        out_specs=vmem_spec,
        scratch_shapes=scratch_shapes,
    )(*operands)

    return out_pad[:B, :O]


def init_params(key, vocab_size, embed_dim, hidden_size, output_size,
                hidden_depth):
    """Deterministic synthetic parameters matching the PyTorch module shapes."""
    keys = jax.random.split(key, 3 + 4 * hidden_depth)
    ki = iter(keys)
    params = {}
    params["C"] = 0.1 * jax.random.normal(next(ki), (vocab_size, embed_dim),
                                          jnp.float32)
    rnn = []
    for layer in range(hidden_depth):
        in_dim = embed_dim if layer == 0 else hidden_size
        rnn.append({
            "weight_ih": 0.1 * jax.random.normal(next(ki),
                                                 (hidden_size, in_dim),
                                                 jnp.float32),
            "weight_hh": 0.1 * jax.random.normal(next(ki),
                                                 (hidden_size, hidden_size),
                                                 jnp.float32),
            "bias_ih": 0.1 * jax.random.normal(next(ki), (hidden_size,),
                                               jnp.float32),
            "bias_hh": 0.1 * jax.random.normal(next(ki), (hidden_size,),
                                               jnp.float32),
        })
    params["rnn"] = rnn
    params["W2_w"] = 0.1 * jax.random.normal(next(ki),
                                             (output_size, hidden_size),
                                             jnp.float32)
    params["W2_b"] = 0.1 * jax.random.normal(next(ki), (output_size,),
                                             jnp.float32)
    return params


def reference_forward(encoded_clue, params, hidden_depth=1):
    """Pure-JAX reference mirroring torch semantics exactly."""
    emb = jnp.take(params["C"], encoded_clue, axis=0)        # (B, T, E)
    B, T, _ = emb.shape
    H = params["rnn"][0]["weight_hh"].shape[0]
    x = emb
    for layer in range(hidden_depth):
        p = params["rnn"][layer]
        h = jnp.zeros((B, H), jnp.float32)
        hs = []
        for t in range(T):
            h = jax.nn.relu(x[:, t, :] @ p["weight_ih"].T + p["bias_ih"]
                            + h @ p["weight_hh"].T + p["bias_hh"])
            hs.append(h)
        x = jnp.stack(hs, axis=1)
    return x[:, -1, :] @ params["W2_w"].T + params["W2_b"]


if __name__ == "__main__":
    vocab_size = 64
    embed_dim = 32
    hidden_size = 32
    output_size = 16
    B, T = 2, 8

    key = jax.random.PRNGKey(0)
    k_tok, k_par = jax.random.split(key)
    encoded_clue = jax.random.randint(k_tok, (B, T), 0, vocab_size,
                                      dtype=jnp.int32)

    # Exercise both the single-layer fast path and the fused multi-layer path.
    for hidden_depth in (1, 2):
        params = init_params(k_par, vocab_size, embed_dim, hidden_size,
                             output_size, hidden_depth)
        out = recurrent_crossword_forward(encoded_clue, params,
                                          hidden_depth=hidden_depth)
        out = jax.block_until_ready(out)
        ref = reference_forward(encoded_clue, params,
                                hidden_depth=hidden_depth)
        assert out.shape == (B, output_size)
        assert jnp.allclose(out, ref, rtol=1e-4, atol=1e-5), \
            f"mismatch vs reference (hidden_depth={hidden_depth})"

    print("KERNEL_OK")
</pallas_src>

<mosaic_0001>
module attributes {stable_mosaic.version = 11 : i64} {
  func.func @kernel(%arg0: memref<64x128xf32, #tpu.memory_space<vmem>>, %arg1: memref<128x128xf32, #tpu.memory_space<vmem>>, %arg2: memref<128x128xf32, #tpu.memory_space<vmem>>, %arg3: memref<1x128xf32, #tpu.memory_space<vmem>>, %arg4: memref<128x128xf32, #tpu.memory_space<vmem>>, %arg5: memref<1x128xf32, #tpu.memory_space<vmem>>, %arg6: memref<8x128xf32, #tpu.memory_space<vmem>>, %arg7: memref<64x128xf32, #tpu.memory_space<vmem>>) attributes {dimension_semantics = [], scalar_prefetch = 0 : i64, scratch_operands = 1 : i64, tpu.core_type = #tpu.core_type<tc>} {
    %c0 = arith.constant 0 : index
    %c0_0 = arith.constant 0 : index
    %0 = vector.load %arg0[%c0, %c0_0] : memref<64x128xf32, #tpu.memory_space<vmem>>, vector<64x128xf32>
    %c0_1 = arith.constant 0 : index
    %c0_2 = arith.constant 0 : index
    %1 = vector.load %arg1[%c0_1, %c0_2] : memref<128x128xf32, #tpu.memory_space<vmem>>, vector<128x128xf32>
    %cst = arith.constant dense<0.000000e+00> : vector<64x128xf32>
    %2 = tpu.matmul %0, %1, %cst {dimension_numbers = #tpu.dot_dimension_numbers<[1], [0], [0], [1], [0, 0, 1, 1], [], []>} : vector<64x128xf32>, vector<128x128xf32>, vector<64x128xf32> -> vector<64x128xf32>
    %c0_3 = arith.constant 0 : index
    %c0_4 = arith.constant 0 : index
    %3 = vector.load %arg3[%c0_3, %c0_4] : memref<1x128xf32, #tpu.memory_space<vmem>>, vector<1x128xf32>
    %4 = vector.broadcast %3 : vector<1x128xf32> to vector<64x128xf32>
    %5 = arith.addf %2, %4 : vector<64x128xf32>
    %c0_5 = arith.constant 0 : index
    %c0_6 = arith.constant 0 : index
    %6 = vector.load %arg7[%c0_5, %c0_6] : memref<64x128xf32, #tpu.memory_space<vmem>>, vector<64x128xf32>
    tpu.vector_store %arg7[%c0_5, %c0_6], %5 {strides = array<i32>} : memref<64x128xf32, #tpu.memory_space<vmem>>, vector<64x128xf32>,
    %c0_7 = arith.constant 0 : index
    %c0_8 = arith.constant 0 : index
    %7 = vector.load %arg2[%c0_7, %c0_8] : memref<128x128xf32, #tpu.memory_space<vmem>>, vector<128x128xf32>
    %cst_9 = arith.constant 0.000000e+00 : f32
    %8 = vector.broadcast %cst_9 : f32 to vector<8x128xf32>
    %c0_i32 = arith.constant 0 : i32
    %c8_i32 = arith.constant 8 : i32
    %9 = arith.muli %c0_i32, %c8_i32 : i32
    %10 = arith.index_cast %9 : i32 to index
    %c0_10 = arith.constant 0 : index
    %11 = vector.load %arg7[%10, %c0_10] : memref<64x128xf32, #tpu.memory_space<vmem>>, vector<8x128xf32>
    %cst_11 = arith.constant dense<0.000000e+00> : vector<8x128xf32>
    %12 = tpu.matmul %8, %7, %cst_11 {dimension_numbers = #tpu.dot_dimension_numbers<[1], [0], [0], [1], [0, 0, 1, 1], [], []>} : vector<8x128xf32>, vector<128x128xf32>, vector<8x128xf32> -> vector<8x128xf32>
    %13 = arith.addf %11, %12 : vector<8x128xf32>
    %cst_12 = arith.constant 0.000000e+00 : f32
    %14 = vector.broadcast %cst_12 : f32 to vector<8x128xf32>
    %15 = arith.maximumf %13, %14 : vector<8x128xf32>
    %c1_i32 = arith.constant 1 : i32
    %c8_i32_13 = arith.constant 8 : i32
    %16 = arith.muli %c1_i32, %c8_i32_13 : i32
    %17 = arith.index_cast %16 : i32 to index
    %c0_14 = arith.constant 0 : index
    %18 = vector.load %arg7[%17, %c0_14] : memref<64x128xf32, #tpu.memory_space<vmem>>, vector<8x128xf32>
    %cst_15 = arith.constant dense<0.000000e+00> : vector<8x128xf32>
    %19 = tpu.matmul %15, %7, %cst_15 {dimension_numbers = #tpu.dot_dimension_numbers<[1], [0], [0], [1], [0, 0, 1, 1], [], []>} : vector<8x128xf32>, vector<128x128xf32>, vector<8x128xf32> -> vector<8x128xf32>
    %20 = arith.addf %18, %19 : vector<8x128xf32>
    %cst_16 = arith.constant 0.000000e+00 : f32
    %21 = vector.broadcast %cst_16 : f32 to vector<8x128xf32>
    %22 = arith.maximumf %20, %21 : vector<8x128xf32>
    %c2_i32 = arith.constant 2 : i32
    %c8_i32_17 = arith.constant 8 : i32
    %23 = arith.muli %c2_i32, %c8_i32_17 : i32
    %24 = arith.index_cast %23 : i32 to index
    %c0_18 = arith.constant 0 : index
    %25 = vector.load %arg7[%24, %c0_18] : memref<64x128xf32, #tpu.memory_space<vmem>>, vector<8x128xf32>
    %cst_19 = arith.constant dense<0.000000e+00> : vector<8x128xf32>
    %26 = tpu.matmul %22, %7, %cst_19 {dimension_numbers = #tpu.dot_dimension_numbers<[1], [0], [0], [1], [0, 0, 1, 1], [], []>} : vector<8x128xf32>, vector<128x128xf32>, vector<8x128xf32> -> vector<8x128xf32>
    %27 = arith.addf %25, %26 : vector<8x128xf32>
    %cst_20 = arith.constant 0.000000e+00 : f32
    %28 = vector.broadcast %cst_20 : f32 to vector<8x128xf32>
    %29 = arith.maximumf %27, %28 : vector<8x128xf32>
    %c3_i32 = arith.constant 3 : i32
    %c8_i32_21 = arith.constant 8 : i32
    %30 = arith.muli %c3_i32, %c8_i32_21 : i32
    %31 = arith.index_cast %30 : i32 to index
    %c0_22 = arith.constant 0 : index
    %32 = vector.load %arg7[%31, %c0_22] : memref<64x128xf32, #tpu.memory_space<vmem>>, vector<8x128xf32>
    %cst_23 = arith.constant dense<0.000000e+00> : vector<8x128xf32>
    %33 = tpu.matmul %29, %7, %cst_23 {dimension_numbers = #tpu.dot_dimension_numbers<[1], [0], [0], [1], [0, 0, 1, 1], [], []>} : vector<8x128xf32>, vector<128x128xf32>, vector<8x128xf32> -> vector<8x128xf32>
    %34 = arith.addf %32, %33 : vector<8x128xf32>
    %cst_24 = arith.constant 0.000000e+00 : f32
    %35 = vector.broadcast %cst_24 : f32 to vector<8x128xf32>
    %36 = arith.maximumf %34, %35 : vector<8x128xf32>
    %c4_i32 = arith.constant 4 : i32
    %c8_i32_25 = arith.constant 8 : i32
    %37 = arith.muli %c4_i32, %c8_i32_25 : i32
    %38 = arith.index_cast %37 : i32 to index
    %c0_26 = arith.constant 0 : index
    %39 = vector.load %arg7[%38, %c0_26] : memref<64x128xf32, #tpu.memory_space<vmem>>, vector<8x128xf32>
    %cst_27 = arith.constant dense<0.000000e+00> : vector<8x128xf32>
    %40 = tpu.matmul %36, %7, %cst_27 {dimension_numbers = #tpu.dot_dimension_numbers<[1], [0], [0], [1], [0, 0, 1, 1], [], []>} : vector<8x128xf32>, vector<128x128xf32>, vector<8x128xf32> -> vector<8x128xf32>
    %41 = arith.addf %39, %40 : vector<8x128xf32>
    %cst_28 = arith.constant 0.000000e+00 : f32
    %42 = vector.broadcast %cst_28 : f32 to vector<8x128xf32>
    %43 = arith.maximumf %41, %42 : vector<8x128xf32>
    %c5_i32 = arith.constant 5 : i32
    %c8_i32_29 = arith.constant 8 : i32
    %44 = arith.muli %c5_i32, %c8_i32_29 : i32
    %45 = arith.index_cast %44 : i32 to index
    %c0_30 = arith.constant 0 : index
    %46 = vector.load %arg7[%45, %c0_30] : memref<64x128xf32, #tpu.memory_space<vmem>>, vector<8x128xf32>
    %cst_31 = arith.constant dense<0.000000e+00> : vector<8x128xf32>
    %47 = tpu.matmul %43, %7, %cst_31 {dimension_numbers = #tpu.dot_dimension_numbers<[1], [0], [0], [1], [0, 0, 1, 1], [], []>} : vector<8x128xf32>, vector<128x128xf32>, vector<8x128xf32> -> vector<8x128xf32>
    %48 = arith.addf %46, %47 : vector<8x128xf32>
    %cst_32 = arith.constant 0.000000e+00 : f32
    %49 = vector.broadcast %cst_32 : f32 to vector<8x128xf32>
    %50 = arith.maximumf %48, %49 : vector<8x128xf32>
    %c6_i32 = arith.constant 6 : i32
    %c8_i32_33 = arith.constant 8 : i32
    %51 = arith.muli %c6_i32, %c8_i32_33 : i32
    %52 = arith.index_cast %51 : i32 to index
    %c0_34 = arith.constant 0 : index
    %53 = vector.load %arg7[%52, %c0_34] : memref<64x128xf32, #tpu.memory_space<vmem>>, vector<8x128xf32>
    %cst_35 = arith.constant dense<0.000000e+00> : vector<8x128xf32>
    %54 = tpu.matmul %50, %7, %cst_35 {dimension_numbers = #tpu.dot_dimension_numbers<[1], [0], [0], [1], [0, 0, 1, 1], [], []>} : vector<8x128xf32>, vector<128x128xf32>, vector<8x128xf32> -> vector<8x128xf32>
    %55 = arith.addf %53, %54 : vector<8x128xf32>
    %cst_36 = arith.constant 0.000000e+00 : f32
    %56 = vector.broadcast %cst_36 : f32 to vector<8x128xf32>
    %57 = arith.maximumf %55, %56 : vector<8x128xf32>
    %c7_i32 = arith.constant 7 : i32
    %c8_i32_37 = arith.constant 8 : i32
    %58 = arith.muli %c7_i32, %c8_i32_37 : i32
    %59 = arith.index_cast %58 : i32 to index
    %c0_38 = arith.constant 0 : index
    %60 = vector.load %arg7[%59, %c0_38] : memref<64x128xf32, #tpu.memory_space<vmem>>, vector<8x128xf32>
    %cst_39 = arith.constant dense<0.000000e+00> : vector<8x128xf32>
    %61 = tpu.matmul %57, %7, %cst_39 {dimension_numbers = #tpu.dot_dimension_numbers<[1], [0], [0], [1], [0, 0, 1, 1], [], []>} : vector<8x128xf32>, vector<128x128xf32>, vector<8x128xf32> -> vector<8x128xf32>
    %62 = arith.addf %60, %61 : vector<8x128xf32>
    %cst_40 = arith.constant 0.000000e+00 : f32
    %63 = vector.broadcast %cst_40 : f32 to vector<8x128xf32>
    %64 = arith.maximumf %62, %63 : vector<8x128xf32>
    %c8_i32_41 = arith.constant 8 : i32
    %c0_42 = arith.constant 0 : index
    %c0_43 = arith.constant 0 : index
    %65 = vector.load %arg4[%c0_42, %c0_43] : memref<128x128xf32, #tpu.memory_space<vmem>>, vector<128x128xf32>
    %cst_44 = arith.constant dense<0.000000e+00> : vector<8x128xf32>
    %66 = tpu.matmul %64, %65, %cst_44 {dimension_numbers = #tpu.dot_dimension_numbers<[1], [0], [0], [1], [0, 0, 1, 1], [], []>} : vector<8x128xf32>, vector<128x128xf32>, vector<8x128xf32> -> vector<8x128xf32>
    %c0_45 = arith.constant 0 : index
    %c0_46 = arith.constant 0 : index
    %67 = vector.load %arg5[%c0_45, %c0_46] : memref<1x128xf32, #tpu.memory_space<vmem>>, vector<1x128xf32>
    %68 = vector.broadcast %67 : vector<1x128xf32> to vector<8x128xf32>
    %69 = arith.addf %66, %68 : vector<8x128xf32>
    %c0_47 = arith.constant 0 : index
    %c0_48 = arith.constant 0 : index
    %70 = vector.load %arg6[%c0_47, %c0_48] : memref<8x128xf32, #tpu.memory_space<vmem>>, vector<8x128xf32>
    tpu.vector_store %arg6[%c0_47, %c0_48], %69 {strides = array<i32>} : memref<8x128xf32, #tpu.memory_space<vmem>>, vector<8x128xf32>,
    return
  }
}

</mosaic_0001>

<llo_original>
// kernel: recurrent_crossword_forward.1
$region0: #{recurrent_crossword_forward.1}
  #allocation0 [shape = 'u32[]', space=smem, size = 0x4, offset = 0x4, fixed_abs, tag = 'smem constant byte address 0x4 - core index']
  #allocation1 [shape = 'u32[144,128]{1,0:T(1,128)}', space=vmem, size = 0x12000, scoped, tag = 'internal scratch']
  #allocation2 [shape = 'f32[64,128]{1,0:T(8,128)}', space=vmem, size = 0x8000, scoped, tag = 'scratch operand']
  %s0 = inlined_call_operand.vmem [shape: f32[64,128], index: 0, kind: input, shape index: {}]
  %s1 = inlined_call_operand.vmem [shape: f32[128,128], index: 1, kind: input, shape index: {}]
  %s2 = inlined_call_operand.vmem [shape: f32[128,128], index: 2, kind: input, shape index: {}]
  %s3 = inlined_call_operand.vmem [shape: f32[1,128], index: 3, kind: input, shape index: {}]
  %s4 = inlined_call_operand.vmem [shape: f32[128,128], index: 4, kind: input, shape index: {}]
  %s5 = inlined_call_operand.vmem [shape: f32[1,128], index: 5, kind: input, shape index: {}]
  %s6 = inlined_call_operand.vmem [shape: f32[8,128], index: 6, kind: output, shape index: {}]
  %s7 = sld [smem:[#allocation0]]
  $region34: #{recurrent_crossword_forward.1} parent=0
    _
  %s9 = ssub.s32 1, %s7
  %s10 = scalar_select 0, %s9, %s7
  // Predicated region
  $region2: #{recurrent_crossword_forward.1} parent=0 // pred_check
    _
  $region3: #{recurrent_crossword_forward.1} parent=0 // pred_check_branch
    %12 = sbr.rel (0) target = $region5
  $region4: #{recurrent_crossword_forward.1} parent=0 // pred_region
    _
  $region5: #{recurrent_crossword_forward.1} parent=0 // pred_fallthru
    _
  // Predicated region
  $region6: #{recurrent_crossword_forward.1} parent=0 // pred_check
    _
  $region7: #{recurrent_crossword_forward.1} parent=0 // pred_check_branch
    %14 = sbr.rel (0) target = $region9
  $region8: #{recurrent_crossword_forward.1} parent=0 // pred_region
    _
  $region9: #{recurrent_crossword_forward.1} parent=0 // pred_fallthru
    _
  // Predicated region
  $region10: #{recurrent_crossword_forward.1} parent=0 // pred_check
    _
  $region11: #{recurrent_crossword_forward.1} parent=0 // pred_check_branch
    %16 = sbr.rel (0) target = $region13
  $region12: #{recurrent_crossword_forward.1} parent=0 // pred_region
    _
  $region13: #{recurrent_crossword_forward.1} parent=0 // pred_fallthru
    _
  // Predicated region
  $region14: #{recurrent_crossword_forward.1} parent=0 // pred_check
    _
  $region15: #{recurrent_crossword_forward.1} parent=0 // pred_check_branch
    %18 = sbr.rel (0) target = $region17
  $region16: #{recurrent_crossword_forward.1} parent=0 // pred_region
    _
  $region17: #{recurrent_crossword_forward.1} parent=0 // pred_fallthru
    _
  // Predicated region
  $region18: #{recurrent_crossword_forward.1} parent=0 // pred_check
    _
  $region19: #{recurrent_crossword_forward.1} parent=0 // pred_check_branch
    %20 = sbr.rel (0) target = $region21
  $region20: #{recurrent_crossword_forward.1} parent=0 // pred_region
    _
  $region21: #{recurrent_crossword_forward.1} parent=0 // pred_fallthru
    _
  // Predicated region
  $region22: #{recurrent_crossword_forward.1} parent=0 // pred_check
    _
  $region23: #{recurrent_crossword_forward.1} parent=0 // pred_check_branch
    %22 = sbr.rel (0) target = $region25
  $region24: #{recurrent_crossword_forward.1} parent=0 // pred_region
    _
  $region25: #{recurrent_crossword_forward.1} parent=0 // pred_fallthru
    _
  %v23 = vld [vmem:[%s0] sm:$0xff]
  %v24 = vld [vmem:[%s0 + $0x8] sm:$0xff]
  %v25 = vld [vmem:[%s0 + $0x10] sm:$0xff]
  %v26 = vld [vmem:[%s0 + $0x18] sm:$0xff]
  %v27 = vld [vmem:[%s0 + $0x20] sm:$0xff]
  %v28 = vld [vmem:[%s0 + $0x28] sm:$0xff]
  %v29 = vld [vmem:[%s0 + $0x30] sm:$0xff]
  %v30 = vld [vmem:[%s0 + $0x38] sm:$0xff]
  %v31 = vld [vmem:[%s1] sm:$0xff]
  %v32 = vld [vmem:[%s1 + $0x8] sm:$0xff]
  %v33 = vld [vmem:[%s1 + $0x10] sm:$0xff]
  %v34 = vld [vmem:[%s1 + $0x18] sm:$0xff]
  %v35 = vld [vmem:[%s1 + $0x20] sm:$0xff]
  %v36 = vld [vmem:[%s1 + $0x28] sm:$0xff]
  %v37 = vld [vmem:[%s1 + $0x30] sm:$0xff]
  %v38 = vld [vmem:[%s1 + $0x38] sm:$0xff]
  %v39 = vld [vmem:[%s1 + $0x40] sm:$0xff]
  %v40 = vld [vmem:[%s1 + $0x48] sm:$0xff]
  %v41 = vld [vmem:[%s1 + $0x50] sm:$0xff]
  %v42 = vld [vmem:[%s1 + $0x58] sm:$0xff]
  %v43 = vld [vmem:[%s1 + $0x60] sm:$0xff]
  %v44 = vld [vmem:[%s1 + $0x68] sm:$0xff]
  %v45 = vld [vmem:[%s1 + $0x70] sm:$0xff]
  %v46 = vld [vmem:[%s1 + $0x78] sm:$0xff]
  %v47 = vld [vmem:[%s3] sm:$0x1]
  %v49 = vlaneseq
  %v50 = vshrl.u32 %v49, 7
  %v51 = vsub.s32 0, %v50
  %v52 = vrot.slane %v47, %v51
  %54 = vmatprep.subr.mxu0 0.0
  %55 = vmatpush1.msra.mxu0 %v31
  %56 = vmatprep.subr.mxu0 0.0
  %57 = vmatpush1.msra.mxu0 %v32
  %58 = vmatprep.subr.mxu0 0.0
  %59 = vmatpush1.msra.mxu0 %v33
  %60 = vmatprep.subr.mxu0 0.0
  %61 = vmatpush1.msra.mxu0 %v34
  %62 = vmatprep.subr.mxu0 0.0
  %63 = vmatpush1.msra.mxu0 %v35
  %64 = vmatprep.subr.mxu0 0.0
  %65 = vmatpush1.msra.mxu0 %v36
  %66 = vmatprep.subr.mxu0 0.0
  %67 = vmatpush1.msra.mxu0 %v37
  %68 = vmatprep.subr.mxu0 0.0
  %69 = vmatpush1.msra.mxu0 %v38
  %70 = vmatprep.subr.mxu0 0.0
  %71 = vmatpush1.msra.mxu0 %v39
  %72 = vmatprep.subr.mxu0 0.0
  %73 = vmatpush1.msra.mxu0 %v40
  %74 = vmatprep.subr.mxu0 0.0
  %75 = vmatpush1.msra.mxu0 %v41
  %76 = vmatprep.subr.mxu0 0.0
  %77 = vmatpush1.msra.mxu0 %v42
  %78 = vmatprep.subr.mxu0 0.0
  %79 = vmatpush1.msra.mxu0 %v43
  %80 = vmatprep.subr.mxu0 0.0
  %81 = vmatpush1.msra.mxu0 %v44
  %82 = vmatprep.subr.mxu0 0.0
  %83 = vmatpush1.msra.mxu0 %v45
  %84 = vmatprep.subr.mxu0 0.0
  %85 = vmatpush1.msra.mxu0 %v46
  %86 = vmatprep.subr.mxu0 0.0
  %87 = vmatpush1.msra.mxu0 0.0
  %88 = vmatprep.subr.mxu0 0.0
  %89 = vmatpush1.msra.mxu0 0.0
  %90 = vmatprep.subr.mxu0 0.0
  %91 = vmatpush1.msra.mxu0 0.0
  %92 = vmatprep.subr.mxu0 0.0
  %93 = vmatpush1.msra.mxu0 0.0
  %94 = vmatprep.subr.mxu0 0.0
  %95 = vmatpush1.msra.mxu0 0.0
  %96 = vmatprep.subr.mxu0 0.0
  %97 = vmatpush1.msra.mxu0 0.0
  %98 = vmatprep.subr.mxu0 0.0
  %99 = vmatpush1.msra.mxu0 0.0
  %100 = vmatprep.subr.mxu0 0.0
  %101 = vmatpush1.msra.mxu0 0.0
  %102 = vmatprep.subr.mxu0 0.0
  %103 = vmatpush1.msra.mxu0 0.0
  %104 = vmatprep.subr.mxu0 0.0
  %105 = vmatpush1.msra.mxu0 0.0
  %106 = vmatprep.subr.mxu0 0.0
  %107 = vmatpush1.msra.mxu0 0.0
  %108 = vmatprep.subr.mxu0 0.0
  %109 = vmatpush1.msra.mxu0 0.0
  %110 = vmatprep.subr.mxu0 0.0
  %111 = vmatpush1.msra.mxu0 0.0
  %112 = vmatprep.subr.mxu0 0.0
  %113 = vmatpush1.msra.mxu0 0.0
  %114 = vmatprep.subr.mxu0 0.0
  %115 = vmatpush1.msra.mxu0 0.0
  %116 = vmatprep.subr.mxu0 0.0
  %117 = vmatpush1.msra.mxu0 0.0
  %118 = vmatprep.mubr.f32.mxu0 0.0
  %119 = vmatmul.mubr.f32.gmra.mrb[0].mxu0 %v23
  %v120 = vpop.f32.mrb[0].mxu0
  %v121 = vadd.f32 %v52, %v120
  %v122 = vpop.f32.mrb[0].mxu0
  %123 = vmatprep.mubr.f32.mxu0 0.0
  %124 = vmatmul.mubr.f32.gmra.mrb[0].mxu0 %v24
  %v125 = vpop.f32.mrb[0].mxu0
  %v126 = vadd.f32 %v52, %v125
  %v127 = vpop.f32.mrb[0].mxu0
  %128 = vmatprep.mubr.f32.mxu0 0.0
  %129 = vmatmul.mubr.f32.gmra.mrb[0].mxu0 %v25
  %v130 = vpop.f32.mrb[0].mxu0
  %v131 = vadd.f32 %v52, %v130
  %v132 = vpop.f32.mrb[0].mxu0
  %133 = vmatprep.mubr.f32.mxu0 0.0
  %134 = vmatmul.mubr.f32.gmra.mrb[0].mxu0 %v26
  %v135 = vpop.f32.mrb[0].mxu0
  %v136 = vadd.f32 %v52, %v135
  %v137 = vpop.f32.mrb[0].mxu0
  %138 = vmatprep.mubr.f32.mxu0 0.0
  %139 = vmatmul.mubr.f32.gmra.mrb[0].mxu0 %v27
  %v140 = vpop.f32.mrb[0].mxu0
  %v141 = vadd.f32 %v52, %v140
  %v142 = vpop.f32.mrb[0].mxu0
  %143 = vmatprep.mubr.f32.mxu0 0.0
  %144 = vmatmul.mubr.f32.gmra.mrb[0].mxu0 %v28
  %v145 = vpop.f32.mrb[0].mxu0
  %v146 = vadd.f32 %v52, %v145
  %v147 = vpop.f32.mrb[0].mxu0
  %148 = vmatprep.mubr.f32.mxu0 0.0
  %149 = vmatmul.mubr.f32.gmra.mrb[0].mxu0 %v29
  %v150 = vpop.f32.mrb[0].mxu0
  %v151 = vadd.f32 %v52, %v150
  %v152 = vpop.f32.mrb[0].mxu0
  %153 = vmatprep.mubr.f32.mxu0 0.0
  %154 = vmatmul.mubr.f32.gmra.mrb[0].mxu0 %v30
  %v155 = vpop.f32.mrb[0].mxu0
  %v156 = vadd.f32 %v52, %v155
  %v157 = vpop.f32.mrb[0].mxu0
  %158 = vdwg.mxu0
  %159 = vst [vmem:[#allocation2] sm:$0xff] %v121
  %160 = vst [vmem:[#allocation2 + $0x8] sm:$0xff] %v126
  %161 = vst [vmem:[#allocation2 + $0x10] sm:$0xff] %v131
  %162 = vst [vmem:[#allocation2 + $0x18] sm:$0xff] %v136
  %163 = vst [vmem:[#allocation2 + $0x20] sm:$0xff] %v141
  %164 = vst [vmem:[#allocation2 + $0x28] sm:$0xff] %v146
  %165 = vst [vmem:[#allocation2 + $0x30] sm:$0xff] %v151
  %166 = vst [vmem:[#allocation2 + $0x38] sm:$0xff] %v156
  %v167 = vld [vmem:[%s2] sm:$0xff]
  %v168 = vld [vmem:[%s2 + $0x8] sm:$0xff]
  %v169 = vld [vmem:[%s2 + $0x10] sm:$0xff]
  %v170 = vld [vmem:[%s2 + $0x18] sm:$0xff]
  %v171 = vld [vmem:[%s2 + $0x20] sm:$0xff]
  %v172 = vld [vmem:[%s2 + $0x28] sm:$0xff]
  %v173 = vld [vmem:[%s2 + $0x30] sm:$0xff]
  %v174 = vld [vmem:[%s2 + $0x38] sm:$0xff]
  %v175 = vld [vmem:[%s2 + $0x40] sm:$0xff]
  %v176 = vld [vmem:[%s2 + $0x48] sm:$0xff]
  %v177 = vld [vmem:[%s2 + $0x50] sm:$0xff]
  %v178 = vld [vmem:[%s2 + $0x58] sm:$0xff]
  %v179 = vld [vmem:[%s2 + $0x60] sm:$0xff]
  %v180 = vld [vmem:[%s2 + $0x68] sm:$0xff]
  %v181 = vld [vmem:[%s2 + $0x70] sm:$0xff]
  %v182 = vld [vmem:[%s2 + $0x78] sm:$0xff]
  %v183 = vld [vmem:[#allocation2] sm:$0xff]
  %184 = vmatprep.subr.mxu0 0.0
  %185 = vmatpush1.msra.mxu0 %v167
  %186 = vmatprep.subr.mxu0 0.0
  %187 = vmatpush1.msra.mxu0 %v168
  %188 = vmatprep.subr.mxu0 0.0
  %189 = vmatpush1.msra.mxu0 %v169
  %190 = vmatprep.subr.mxu0 0.0
  %191 = vmatpush1.msra.mxu0 %v170
  %192 = vmatprep.subr.mxu0 0.0
  %193 = vmatpush1.msra.mxu0 %v171
  %194 = vmatprep.subr.mxu0 0.0
  %195 = vmatpush1.msra.mxu0 %v172
  %196 = vmatprep.subr.mxu0 0.0
  %197 = vmatpush1.msra.mxu0 %v173
  %198 = vmatprep.subr.mxu0 0.0
  %199 = vmatpush1.msra.mxu0 %v174
  %200 = vmatprep.subr.mxu0 0.0
  %201 = vmatpush1.msra.mxu0 %v175
  %202 = vmatprep.subr.mxu0 0.0
  %203 = vmatpush1.msra.mxu0 %v176
  %204 = vmatprep.subr.mxu0 0.0
  %205 = vmatpush1.msra.mxu0 %v177
  %206 = vmatprep.subr.mxu0 0.0
  %207 = vmatpush1.msra.mxu0 %v178
  %208 = vmatprep.subr.mxu0 0.0
  %209 = vmatpush1.msra.mxu0 %v179
  %210 = vmatprep.subr.mxu0 0.0
  %211 = vmatpush1.msra.mxu0 %v180
  %212 = vmatprep.subr.mxu0 0.0
  %213 = vmatpush1.msra.mxu0 %v181
  %214 = vmatprep.subr.mxu0 0.0
  %215 = vmatpush1.msra.mxu0 %v182
  %216 = vmatprep.subr.mxu0 0.0
  %217 = vmatpush1.msra.mxu0 0.0
  %218 = vmatprep.subr.mxu0 0.0
  %219 = vmatpush1.msra.mxu0 0.0
  %220 = vmatprep.subr.mxu0 0.0
  %221 = vmatpush1.msra.mxu0 0.0
  %222 = vmatprep.subr.mxu0 0.0
  %223 = vmatpush1.msra.mxu0 0.0
  %224 = vmatprep.subr.mxu0 0.0
  %225 = vmatpush1.msra.mxu0 0.0
  %226 = vmatprep.subr.mxu0 0.0
  %227 = vmatpush1.msra.mxu0 0.0
  %228 = vmatprep.subr.mxu0 0.0
  %229 = vmatpush1.msra.mxu0 0.0
  %230 = vmatprep.subr.mxu0 0.0
  %231 = vmatpush1.msra.mxu0 0.0
  %232 = vmatprep.subr.mxu0 0.0
  %233 = vmatpush1.msra.mxu0 0.0
  %234 = vmatprep.subr.mxu0 0.0
  %235 = vmatpush1.msra.mxu0 0.0
  %236 = vmatprep.subr.mxu0 0.0
  %237 = vmatpush1.msra.mxu0 0.0
  %238 = vmatprep.subr.mxu0 0.0
  %239 = vmatpush1.msra.mxu0 0.0
  %240 = vmatprep.subr.mxu0 0.0
  %241 = vmatpush1.msra.mxu0 0.0
  %242 = vmatprep.subr.mxu0 0.0
  %243 = vmatpush1.msra.mxu0 0.0
  %244 = vmatprep.subr.mxu0 0.0
  %245 = vmatpush1.msra.mxu0 0.0
  %246 = vmatprep.subr.mxu0 0.0
  %247 = vmatpush1.msra.mxu0 0.0
  %248 = vmatprep.mubr.f32.mxu0 0.0
  %249 = vmatmul.mubr.f32.gmra.mrb[0].mxu0 0.0
  %v250 = vpop.f32.mrb[0].mxu0
  %v251 = vadd.f32 0.0, %v250
  %v252 = vpop.f32.mrb[0].mxu0
  %253 = vdwg.mxu0
  %v254 = vadd.f32 %v183, %v251
  %v255 = vmax.f32 %v254, 0.0
  %v256 = vld [vmem:[#allocation2 + $0x8] sm:$0xff]
  %257 = vmatprep.subr.mxu0 0.0
  %258 = vmatpush1.msra.mxu0 %v167
  %259 = vmatprep.subr.mxu0 0.0
  %260 = vmatpush1.msra.mxu0 %v168
  %261 = vmatprep.subr.mxu0 0.0
  %262 = vmatpush1.msra.mxu0 %v169
  %263 = vmatprep.subr.mxu0 0.0
  %264 = vmatpush1.msra.mxu0 %v170
  %265 = vmatprep.subr.mxu0 0.0
  %266 = vmatpush1.msra.mxu0 %v171
  %267 = vmatprep.subr.mxu0 0.0
  %268 = vmatpush1.msra.mxu0 %v172
  %269 = vmatprep.subr.mxu0 0.0
  %270 = vmatpush1.msra.mxu0 %v173
  %271 = vmatprep.subr.mxu0 0.0
  %272 = vmatpush1.msra.mxu0 %v174
  %273 = vmatprep.subr.mxu0 0.0
  %274 = vmatpush1.msra.mxu0 %v175
  %275 = vmatprep.subr.mxu0 0.0
  %276 = vmatpush1.msra.mxu0 %v176
  %277 = vmatprep.subr.mxu0 0.0
  %278 = vmatpush1.msra.mxu0 %v177
  %279 = vmatprep.subr.mxu0 0.0
  %280 = vmatpush1.msra.mxu0 %v178
  %281 = vmatprep.subr.mxu0 0.0
  %282 = vmatpush1.msra.mxu0 %v179
  %283 = vmatprep.subr.mxu0 0.0
  %284 = vmatpush1.msra.mxu0 %v180
  %285 = vmatprep.subr.mxu0 0.0
  %286 = vmatpush1.msra.mxu0 %v181
  %287 = vmatprep.subr.mxu0 0.0
  %288 = vmatpush1.msra.mxu0 %v182
  %289 = vmatprep.subr.mxu0 0.0
  %290 = vmatpush1.msra.mxu0 0.0
  %291 = vmatprep.subr.mxu0 0.0
  %292 = vmatpush1.msra.mxu0 0.0
  %293 = vmatprep.subr.mxu0 0.0
  %294 = vmatpush1.msra.mxu0 0.0
  %295 = vmatprep.subr.mxu0 0.0
  %296 = vmatpush1.msra.mxu0 0.0
  %297 = vmatprep.subr.mxu0 0.0
  %298 = vmatpush1.msra.mxu0 0.0
  %299 = vmatprep.subr.mxu0 0.0
  %300 = vmatpush1.msra.mxu0 0.0
  %301 = vmatprep.subr.mxu0 0.0
  %302 = vmatpush1.msra.mxu0 0.0
  %303 = vmatprep.subr.mxu0 0.0
  %304 = vmatpush1.msra.mxu0 0.0
  %305 = vmatprep.subr.mxu0 0.0
  %306 = vmatpush1.msra.mxu0 0.0
  %307 = vmatprep.subr.mxu0 0.0
  %308 = vmatpush1.msra.mxu0 0.0
  %309 = vmatprep.subr.mxu0 0.0
  %310 = vmatpush1.msra.mxu0 0.0
  %311 = vmatprep.subr.mxu0 0.0
  %312 = vmatpush1.msra.mxu0 0.0
  %313 = vmatprep.subr.mxu0 0.0
  %314 = vmatpush1.msra.mxu0 0.0
  %315 = vmatprep.subr.mxu0 0.0
  %316 = vmatpush1.msra.mxu0 0.0
  %317 = vmatprep.subr.mxu0 0.0
  %318 = vmatpush1.msra.mxu0 0.0
  %319 = vmatprep.subr.mxu0 0.0
  %320 = vmatpush1.msra.mxu0 0.0
  %321 = vmatprep.mubr.f32.mxu0 0.0
  %322 = vmatmul.mubr.f32.gmra.mrb[0].mxu0 %v255
  %v323 = vpop.f32.mrb[0].mxu0
  %v324 = vadd.f32 0.0, %v323
  %v325 = vpop.f32.mrb[0].mxu0
  %326 = vdwg.mxu0
  %v327 = vadd.f32 %v256, %v324
  %v328 = vmax.f32 %v327, 0.0
  %v329 = vld [vmem:[#allocation2 + $0x10] sm:$0xff]
  %330 = vmatprep.subr.mxu0 0.0
  %331 = vmatpush1.msra.mxu0 %v167
  %332 = vmatprep.subr.mxu0 0.0
  %333 = vmatpush1.msra.mxu0 %v168
  %334 = vmatprep.subr.mxu0 0.0
  %335 = vmatpush1.msra.mxu0 %v169
  %336 = vmatprep.subr.mxu0 0.0
  %337 = vmatpush1.msra.mxu0 %v170
  %338 = vmatprep.subr.mxu0 0.0
  %339 = vmatpush1.msra.mxu0 %v171
  %340 = vmatprep.subr.mxu0 0.0
  %341 = vmatpush1.msra.mxu0 %v172
  %342 = vmatprep.subr.mxu0 0.0
  %343 = vmatpush1.msra.mxu0 %v173
  %344 = vmatprep.subr.mxu0 0.0
  %345 = vmatpush1.msra.mxu0 %v174
  %346 = vmatprep.subr.mxu0 0.0
  %347 = vmatpush1.msra.mxu0 %v175
  %348 = vmatprep.subr.mxu0 0.0
  %349 = vmatpush1.msra.mxu0 %v176
  %350 = vmatprep.subr.mxu0 0.0
  %351 = vmatpush1.msra.mxu0 %v177
  %352 = vmatprep.subr.mxu0 0.0
  %353 = vmatpush1.msra.mxu0 %v178
  %354 = vmatprep.subr.mxu0 0.0
  %355 = vmatpush1.msra.mxu0 %v179
  %356 = vmatprep.subr.mxu0 0.0
  %357 = vmatpush1.msra.mxu0 %v180
  %358 = vmatprep.subr.mxu0 0.0
  %359 = vmatpush1.msra.mxu0 %v181
  %360 = vmatprep.subr.mxu0 0.0
  %361 = vmatpush1.msra.mxu0 %v182
  %362 = vmatprep.subr.mxu0 0.0
  %363 = vmatpush1.msra.mxu0 0.0
  %364 = vmatprep.subr.mxu0 0.0
  %365 = vmatpush1.msra.mxu0 0.0
  %366 = vmatprep.subr.mxu0 0.0
  %367 = vmatpush1.msra.mxu0 0.0
  %368 = vmatprep.subr.mxu0 0.0
  %369 = vmatpush1.msra.mxu0 0.0
  %370 = vmatprep.subr.mxu0 0.0
  %371 = vmatpush1.msra.mxu0 0.0
  %372 = vmatprep.subr.mxu0 0.0
  %373 = vmatpush1.msra.mxu0 0.0
  %374 = vmatprep.subr.mxu0 0.0
  %375 = vmatpush1.msra.mxu0 0.0
  %376 = vmatprep.subr.mxu0 0.0
  %377 = vmatpush1.msra.mxu0 0.0
  %378 = vmatprep.subr.mxu0 0.0
  %379 = vmatpush1.msra.mxu0 0.0
  %380 = vmatprep.subr.mxu0 0.0
  %381 = vmatpush1.msra.mxu0 0.0
  %382 = vmatprep.subr.mxu0 0.0
  %383 = vmatpush1.msra.mxu0 0.0
  %384 = vmatprep.subr.mxu0 0.0
  %385 = vmatpush1.msra.mxu0 0.0
  %386 = vmatprep.subr.mxu0 0.0
  %387 = vmatpush1.msra.mxu0 0.0
  %388 = vmatprep.subr.mxu0 0.0
  %389 = vmatpush1.msra.mxu0 0.0
  %390 = vmatprep.subr.mxu0 0.0
  %391 = vmatpush1.msra.mxu0 0.0
  %392 = vmatprep.subr.mxu0 0.0
  %393 = vmatpush1.msra.mxu0 0.0
  %394 = vmatprep.mubr.f32.mxu0 0.0
  %395 = vmatmul.mubr.f32.gmra.mrb[0].mxu0 %v328
  %v396 = vpop.f32.mrb[0].mxu0
  %v397 = vadd.f32 0.0, %v396
  %v398 = vpop.f32.mrb[0].mxu0
  %399 = vdwg.mxu0
  %v400 = vadd.f32 %v329, %v397
  %v401 = vmax.f32 %v400, 0.0
  %v402 = vld [vmem:[#allocation2 + $0x18] sm:$0xff]
  %403 = vmatprep.subr.mxu0 0.0
  %404 = vmatpush1.msra.mxu0 %v167
  %405 = vmatprep.subr.mxu0 0.0
  %406 = vmatpush1.msra.mxu0 %v168
  %407 = vmatprep.subr.mxu0 0.0
  %408 = vmatpush1.msra.mxu0 %v169
  %409 = vmatprep.subr.mxu0 0.0
  %410 = vmatpush1.msra.mxu0 %v170
  %411 = vmatprep.subr.mxu0 0.0
  %412 = vmatpush1.msra.mxu0 %v171
  %413 = vmatprep.subr.mxu0 0.0
  %414 = vmatpush1.msra.mxu0 %v172
  %415 = vmatprep.subr.mxu0 0.0
  %416 = vmatpush1.msra.mxu0 %v173
  %417 = vmatprep.subr.mxu0 0.0
  %418 = vmatpush1.msra.mxu0 %v174
  %419 = vmatprep.subr.mxu0 0.0
  %420 = vmatpush1.msra.mxu0 %v175
  %421 = vmatprep.subr.mxu0 0.0
  %422 = vmatpush1.msra.mxu0 %v176
  %423 = vmatprep.subr.mxu0 0.0
  %424 = vmatpush1.msra.mxu0 %v177
  %425 = vmatprep.subr.mxu0 0.0
  %426 = vmatpush1.msra.mxu0 %v178
  %427 = vmatprep.subr.mxu0 0.0
  %428 = vmatpush1.msra.mxu0 %v179
  %429 = vmatprep.subr.mxu0 0.0
  %430 = vmatpush1.msra.mxu0 %v180
  %431 = vmatprep.subr.mxu0 0.0
  %432 = vmatpush1.msra.mxu0 %v181
  %433 = vmatprep.subr.mxu0 0.0
  %434 = vmatpush1.msra.mxu0 %v182
  %435 = vmatprep.subr.mxu0 0.0
  %436 = vmatpush1.msra.mxu0 0.0
  %437 = vmatprep.subr.mxu0 0.0
  %438 = vmatpush1.msra.mxu0 0.0
  %439 = vmatprep.subr.mxu0 0.0
  %440 = vmatpush1.msra.mxu0 0.0
  %441 = vmatprep.subr.mxu0 0.0
  %442 = vmatpush1.msra.mxu0 0.0
  %443 = vmatprep.subr.mxu0 0.0
  %444 = vmatpush1.msra.mxu0 0.0
  %445 = vmatprep.subr.mxu0 0.0
  %446 = vmatpush1.msra.mxu0 0.0
  %447 = vmatprep.subr.mxu0 0.0
  %448 = vmatpush1.msra.mxu0 0.0
  %449 = vmatprep.subr.mxu0 0.0
  %450 = vmatpush1.msra.mxu0 0.0
  %451 = vmatprep.subr.mxu0 0.0
  %452 = vmatpush1.msra.mxu0 0.0
  %453 = vmatprep.subr.mxu0 0.0
  %454 = vmatpush1.msra.mxu0 0.0
  %455 = vmatprep.subr.mxu0 0.0
  %456 = vmatpush1.msra.mxu0 0.0
  %457 = vmatprep.subr.mxu0 0.0
  %458 = vmatpush1.msra.mxu0 0.0
  %459 = vmatprep.subr.mxu0 0.0
  %460 = vmatpush1.msra.mxu0 0.0
  %461 = vmatprep.subr.mxu0 0.0
  %462 = vmatpush1.msra.mxu0 0.0
  %463 = vmatprep.subr.mxu0 0.0
  %464 = vmatpush1.msra.mxu0 0.0
  %465 = vmatprep.subr.mxu0 0.0
  %466 = vmatpush1.msra.mxu0 0.0
  %467 = vmatprep.mubr.f32.mxu0 0.0
  %468 = vmatmul.mubr.f32.gmra.mrb[0].mxu0 %v401
  %v469 = vpop.f32.mrb[0].mxu0
  %v470 = vadd.f32 0.0, %v469
  %v471 = vpop.f32.mrb[0].mxu0
  %472 = vdwg.mxu0
  %v473 = vadd.f32 %v402, %v470
  %v474 = vmax.f32 %v473, 0.0
  %v475 = vld [vmem:[#allocation2 + $0x20] sm:$0xff]
  %476 = vmatprep.subr.mxu0 0.0
  %477 = vmatpush1.msra.mxu0 %v167
  %478 = vmatprep.subr.mxu0 0.0
  %479 = vmatpush1.msra.mxu0 %v168
  %480 = vmatprep.subr.mxu0 0.0
  %481 = vmatpush1.msra.mxu0 %v169
  %482 = vmatprep.subr.mxu0 0.0
  %483 = vmatpush1.msra.mxu0 %v170
  %484 = vmatprep.subr.mxu0 0.0
  %485 = vmatpush1.msra.mxu0 %v171
  %486 = vmatprep.subr.mxu0 0.0
  %487 = vmatpush1.msra.mxu0 %v172
  %488 = vmatprep.subr.mxu0 0.0
  %489 = vmatpush1.msra.mxu0 %v173
  %490 = vmatprep.subr.mxu0 0.0
  %491 = vmatpush1.msra.mxu0 %v174
  %492 = vmatprep.subr.mxu0 0.0
  %493 = vmatpush1.msra.mxu0 %v175
  %494 = vmatprep.subr.mxu0 0.0
  %495 = vmatpush1.msra.mxu0 %v176
  %496 = vmatprep.subr.mxu0 0.0
  %497 = vmatpush1.msra.mxu0 %v177
  %498 = vmatprep.subr.mxu0 0.0
  %499 = vmatpush1.msra.mxu0 %v178
  %500 = vmatprep.subr.mxu0 0.0
  %501 = vmatpush1.msra.mxu0 %v179
  %502 = vmatprep.subr.mxu0 0.0
  %503 = vmatpush1.msra.mxu0 %v180
  %504 = vmatprep.subr.mxu0 0.0
  %505 = vmatpush1.msra.mxu0 %v181
  %506 = vmatprep.subr.mxu0 0.0
  %507 = vmatpush1.msra.mxu0 %v182
  %508 = vmatprep.subr.mxu0 0.0
  %509 = vmatpush1.msra.mxu0 0.0
  %510 = vmatprep.subr.mxu0 0.0
  %511 = vmatpush1.msra.mxu0 0.0
  %512 = vmatprep.subr.mxu0 0.0
  %513 = vmatpush1.msra.mxu0 0.0
  %514 = vmatprep.subr.mxu0 0.0
  %515 = vmatpush1.msra.mxu0 0.0
  %516 = vmatprep.subr.mxu0 0.0
  %517 = vmatpush1.msra.mxu0 0.0
  %518 = vmatprep.subr.mxu0 0.0
  %519 = vmatpush1.msra.mxu0 0.0
  %520 = vmatprep.subr.mxu0 0.0
  %521 = vmatpush1.msra.mxu0 0.0
  %522 = vmatprep.subr.mxu0 0.0
  %523 = vmatpush1.msra.mxu0 0.0
  %524 = vmatprep.subr.mxu0 0.0
  %525 = vmatpush1.msra.mxu0 0.0
  %526 = vmatprep.subr.mxu0 0.0
  %527 = vmatpush1.msra.mxu0 0.0
  %528 = vmatprep.subr.mxu0 0.0
  %529 = vmatpush1.msra.mxu0 0.0
  %530 = vmatprep.subr.mxu0 0.0
  %531 = vmatpush1.msra.mxu0 0.0
  %532 = vmatprep.subr.mxu0 0.0
  %533 = vmatpush1.msra.mxu0 0.0
  %534 = vmatprep.subr.mxu0 0.0
  %535 = vmatpush1.msra.mxu0 0.0
  %536 = vmatprep.subr.mxu0 0.0
  %537 = vmatpush1.msra.mxu0 0.0
  %538 = vmatprep.subr.mxu0 0.0
  %539 = vmatpush1.msra.mxu0 0.0
  %540 = vmatprep.mubr.f32.mxu0 0.0
  %541 = vmatmul.mubr.f32.gmra.mrb[0].mxu0 %v474
  %v542 = vpop.f32.mrb[0].mxu0
  %v543 = vadd.f32 0.0, %v542
  %v544 = vpop.f32.mrb[0].mxu0
  %545 = vdwg.mxu0
  %v546 = vadd.f32 %v475, %v543
  %v547 = vmax.f32 %v546, 0.0
  %v548 = vld [vmem:[#allocation2 + $0x28] sm:$0xff]
  %549 = vmatprep.subr.mxu0 0.0
  %550 = vmatpush1.msra.mxu0 %v167
  %551 = vmatprep.subr.mxu0 0.0
  %552 = vmatpush1.msra.mxu0 %v168
  %553 = vmatprep.subr.mxu0 0.0
  %554 = vmatpush1.msra.mxu0 %v169
  %555 = vmatprep.subr.mxu0 0.0
  %556 = vmatpush1.msra.mxu0 %v170
  %557 = vmatprep.subr.mxu0 0.0
  %558 = vmatpush1.msra.mxu0 %v171
  %559 = vmatprep.subr.mxu0 0.0
  %560 = vmatpush1.msra.mxu0 %v172
  %561 = vmatprep.subr.mxu0 0.0
  %562 = vmatpush1.msra.mxu0 %v173
  %563 = vmatprep.subr.mxu0 0.0
  %564 = vmatpush1.msra.mxu0 %v174
  %565 = vmatprep.subr.mxu0 0.0
  %566 = vmatpush1.msra.mxu0 %v175
  %567 = vmatprep.subr.mxu0 0.0
  %568 = vmatpush1.msra.mxu0 %v176
  %569 = vmatprep.subr.mxu0 0.0
  %570 = vmatpush1.msra.mxu0 %v177
  %571 = vmatprep.subr.mxu0 0.0
  %572 = vmatpush1.msra.mxu0 %v178
  %573 = vmatprep.subr.mxu0 0.0
  %574 = vmatpush1.msra.mxu0 %v179
  %575 = vmatprep.subr.mxu0 0.0
  %576 = vmatpush1.msra.mxu0 %v180
  %577 = vmatprep.subr.mxu0 0.0
  %578 = vmatpush1.msra.mxu0 %v181
  %579 = vmatprep.subr.mxu0 0.0
  %580 = vmatpush1.msra.mxu0 %v182
  %581 = vmatprep.subr.mxu0 0.0
  %582 = vmatpush1.msra.mxu0 0.0
  %583 = vmatprep.subr.mxu0 0.0
  %584 = vmatpush1.msra.mxu0 0.0
  %585 = vmatprep.subr.mxu0 0.0
  %586 = vmatpush1.msra.mxu0 0.0
  %587 = vmatprep.subr.mxu0 0.0
  %588 = vmatpush1.msra.mxu0 0.0
  %589 = vmatprep.subr.mxu0 0.0
  %590 = vmatpush1.msra.mxu0 0.0
  %591 = vmatprep.subr.mxu0 0.0
  %592 = vmatpush1.msra.mxu0 0.0
  %593 = vmatprep.subr.mxu0 0.0
  %594 = vmatpush1.msra.mxu0 0.0
  %595 = vmatprep.subr.mxu0 0.0
  %596 = vmatpush1.msra.mxu0 0.0
  %597 = vmatprep.subr.mxu0 0.0
  %598 = vmatpush1.msra.mxu0 0.0
  %599 = vmatprep.subr.mxu0 0.0
  %600 = vmatpush1.msra.mxu0 0.0
  %601 = vmatprep.subr.mxu0 0.0
  %602 = vmatpush1.msra.mxu0 0.0
  %603 = vmatprep.subr.mxu0 0.0
  %604 = vmatpush1.msra.mxu0 0.0
  %605 = vmatprep.subr.mxu0 0.0
  %606 = vmatpush1.msra.mxu0 0.0
  %607 = vmatprep.subr.mxu0 0.0
  %608 = vmatpush1.msra.mxu0 0.0
  %609 = vmatprep.subr.mxu0 0.0
  %610 = vmatpush1.msra.mxu0 0.0
  %611 = vmatprep.subr.mxu0 0.0
  %612 = vmatpush1.msra.mxu0 0.0
  %613 = vmatprep.mubr.f32.mxu0 0.0
  %614 = vmatmul.mubr.f32.gmra.mrb[0].mxu0 %v547
  %v615 = vpop.f32.mrb[0].mxu0
  %v616 = vadd.f32 0.0, %v615
  %v617 = vpop.f32.mrb[0].mxu0
  %618 = vdwg.mxu0
  %v619 = vadd.f32 %v548, %v616
  %v620 = vmax.f32 %v619, 0.0
  %v621 = vld [vmem:[#allocation2 + $0x30] sm:$0xff]
  %622 = vmatprep.subr.mxu0 0.0
  %623 = vmatpush1.msra.mxu0 %v167
  %624 = vmatprep.subr.mxu0 0.0
  %625 = vmatpush1.msra.mxu0 %v168
  %626 = vmatprep.subr.mxu0 0.0
  %627 = vmatpush1.msra.mxu0 %v169
  %628 = vmatprep.subr.mxu0 0.0
  %629 = vmatpush1.msra.mxu0 %v170
  %630 = vmatprep.subr.mxu0 0.0
  %631 = vmatpush1.msra.mxu0 %v171
  %632 = vmatprep.subr.mxu0 0.0
  %633 = vmatpush1.msra.mxu0 %v172
  %634 = vmatprep.subr.mxu0 0.0
  %635 = vmatpush1.msra.mxu0 %v173
  %636 = vmatprep.subr.mxu0 0.0
  %637 = vmatpush1.msra.mxu0 %v174
  %638 = vmatprep.subr.mxu0 0.0
  %639 = vmatpush1.msra.mxu0 %v175
  %640 = vmatprep.subr.mxu0 0.0
  %641 = vmatpush1.msra.mxu0 %v176
  %642 = vmatprep.subr.mxu0 0.0
  %643 = vmatpush1.msra.mxu0 %v177
  %644 = vmatprep.subr.mxu0 0.0
  %645 = vmatpush1.msra.mxu0 %v178
  %646 = vmatprep.subr.mxu0 0.0
  %647 = vmatpush1.msra.mxu0 %v179
  %648 = vmatprep.subr.mxu0 0.0
  %649 = vmatpush1.msra.mxu0 %v180
  %650 = vmatprep.subr.mxu0 0.0
  %651 = vmatpush1.msra.mxu0 %v181
  %652 = vmatprep.subr.mxu0 0.0
  %653 = vmatpush1.msra.mxu0 %v182
  %654 = vmatprep.subr.mxu0 0.0
  %655 = vmatpush1.msra.mxu0 0.0
  %656 = vmatprep.subr.mxu0 0.0
  %657 = vmatpush1.msra.mxu0 0.0
  %658 = vmatprep.subr.mxu0 0.0
  %659 = vmatpush1.msra.mxu0 0.0
  %660 = vmatprep.subr.mxu0 0.0
  %661 = vmatpush1.msra.mxu0 0.0
  %662 = vmatprep.subr.mxu0 0.0
  %663 = vmatpush1.msra.mxu0 0.0
  %664 = vmatprep.subr.mxu0 0.0
  %665 = vmatpush1.msra.mxu0 0.0
  %666 = vmatprep.subr.mxu0 0.0
  %667 = vmatpush1.msra.mxu0 0.0
  %668 = vmatprep.subr.mxu0 0.0
  %669 = vmatpush1.msra.mxu0 0.0
  %670 = vmatprep.subr.mxu0 0.0
  %671 = vmatpush1.msra.mxu0 0.0
  %672 = vmatprep.subr.mxu0 0.0
  %673 = vmatpush1.msra.mxu0 0.0
  %674 = vmatprep.subr.mxu0 0.0
  %675 = vmatpush1.msra.mxu0 0.0
  %676 = vmatprep.subr.mxu0 0.0
  %677 = vmatpush1.msra.mxu0 0.0
  %678 = vmatprep.subr.mxu0 0.0
  %679 = vmatpush1.msra.mxu0 0.0
  %680 = vmatprep.subr.mxu0 0.0
  %681 = vmatpush1.msra.mxu0 0.0
  %682 = vmatprep.subr.mxu0 0.0
  %683 = vmatpush1.msra.mxu0 0.0
  %684 = vmatprep.subr.mxu0 0.0
  %685 = vmatpush1.msra.mxu0 0.0
  %686 = vmatprep.mubr.f32.mxu0 0.0
  %687 = vmatmul.mubr.f32.gmra.mrb[0].mxu0 %v620
  %v688 = vpop.f32.mrb[0].mxu0
  %v689 = vadd.f32 0.0, %v688
  %v690 = vpop.f32.mrb[0].mxu0
  %691 = vdwg.mxu0
  %v692 = vadd.f32 %v621, %v689
  %v693 = vmax.f32 %v692, 0.0
  %v694 = vld [vmem:[#allocation2 + $0x38] sm:$0xff]
  %695 = vmatprep.subr.mxu0 0.0
  %696 = vmatpush1.msra.mxu0 %v167
  %697 = vmatprep.subr.mxu0 0.0
  %698 = vmatpush1.msra.mxu0 %v168
  %699 = vmatprep.subr.mxu0 0.0
  %700 = vmatpush1.msra.mxu0 %v169
  %701 = vmatprep.subr.mxu0 0.0
  %702 = vmatpush1.msra.mxu0 %v170
  %703 = vmatprep.subr.mxu0 0.0
  %704 = vmatpush1.msra.mxu0 %v171
  %705 = vmatprep.subr.mxu0 0.0
  %706 = vmatpush1.msra.mxu0 %v172
  %707 = vmatprep.subr.mxu0 0.0
  %708 = vmatpush1.msra.mxu0 %v173
  %709 = vmatprep.subr.mxu0 0.0
  %710 = vmatpush1.msra.mxu0 %v174
  %711 = vmatprep.subr.mxu0 0.0
  %712 = vmatpush1.msra.mxu0 %v175
  %713 = vmatprep.subr.mxu0 0.0
  %714 = vmatpush1.msra.mxu0 %v176
  %715 = vmatprep.subr.mxu0 0.0
  %716 = vmatpush1.msra.mxu0 %v177
  %717 = vmatprep.subr.mxu0 0.0
  %718 = vmatpush1.msra.mxu0 %v178
  %719 = vmatprep.subr.mxu0 0.0
  %720 = vmatpush1.msra.mxu0 %v179
  %721 = vmatprep.subr.mxu0 0.0
  %722 = vmatpush1.msra.mxu0 %v180
  %723 = vmatprep.subr.mxu0 0.0
  %724 = vmatpush1.msra.mxu0 %v181
  %725 = vmatprep.subr.mxu0 0.0
  %726 = vmatpush1.msra.mxu0 %v182
  %727 = vmatprep.subr.mxu0 0.0
  %728 = vmatpush1.msra.mxu0 0.0
  %729 = vmatprep.subr.mxu0 0.0
  %730 = vmatpush1.msra.mxu0 0.0
  %731 = vmatprep.subr.mxu0 0.0
  %732 = vmatpush1.msra.mxu0 0.0
  %733 = vmatprep.subr.mxu0 0.0
  %734 = vmatpush1.msra.mxu0 0.0
  %735 = vmatprep.subr.mxu0 0.0
  %736 = vmatpush1.msra.mxu0 0.0
  %737 = vmatprep.subr.mxu0 0.0
  %738 = vmatpush1.msra.mxu0 0.0
  %739 = vmatprep.subr.mxu0 0.0
  %740 = vmatpush1.msra.mxu0 0.0
  %741 = vmatprep.subr.mxu0 0.0
  %742 = vmatpush1.msra.mxu0 0.0
  %743 = vmatprep.subr.mxu0 0.0
  %744 = vmatpush1.msra.mxu0 0.0
  %745 = vmatprep.subr.mxu0 0.0
  %746 = vmatpush1.msra.mxu0 0.0
  %747 = vmatprep.subr.mxu0 0.0
  %748 = vmatpush1.msra.mxu0 0.0
  %749 = vmatprep.subr.mxu0 0.0
  %750 = vmatpush1.msra.mxu0 0.0
  %751 = vmatprep.subr.mxu0 0.0
  %752 = vmatpush1.msra.mxu0 0.0
  %753 = vmatprep.subr.mxu0 0.0
  %754 = vmatpush1.msra.mxu0 0.0
  %755 = vmatprep.subr.mxu0 0.0
  %756 = vmatpush1.msra.mxu0 0.0
  %757 = vmatprep.subr.mxu0 0.0
  %758 = vmatpush1.msra.mxu0 0.0
  %759 = vmatprep.mubr.f32.mxu0 0.0
  %760 = vmatmul.mubr.f32.gmra.mrb[0].mxu0 %v693
  %v761 = vpop.f32.mrb[0].mxu0
  %v762 = vadd.f32 0.0, %v761
  %v763 = vpop.f32.mrb[0].mxu0
  %764 = vdwg.mxu0
  %v765 = vadd.f32 %v694, %v762
  %v766 = vmax.f32 %v765, 0.0
  %v767 = vld [vmem:[%s4] sm:$0xff]
  %v768 = vld [vmem:[%s4 + $0x8] sm:$0xff]
  %v769 = vld [vmem:[%s4 + $0x10] sm:$0xff]
  %v770 = vld [vmem:[%s4 + $0x18] sm:$0xff]
  %v771 = vld [vmem:[%s4 + $0x20] sm:$0xff]
  %v772 = vld [vmem:[%s4 + $0x28] sm:$0xff]
  %v773 = vld [vmem:[%s4 + $0x30] sm:$0xff]
  %v774 = vld [vmem:[%s4 + $0x38] sm:$0xff]
  %v775 = vld [vmem:[%s4 + $0x40] sm:$0xff]
  %v776 = vld [vmem:[%s4 + $0x48] sm:$0xff]
  %v777 = vld [vmem:[%s4 + $0x50] sm:$0xff]
  %v778 = vld [vmem:[%s4 + $0x58] sm:$0xff]
  %v779 = vld [vmem:[%s4 + $0x60] sm:$0xff]
  %v780 = vld [vmem:[%s4 + $0x68] sm:$0xff]
  %v781 = vld [vmem:[%s4 + $0x70] sm:$0xff]
  %v782 = vld [vmem:[%s4 + $0x78] sm:$0xff]
  %v783 = vld [vmem:[%s5] sm:$0x1]
  %v785 = vlaneseq
  %v786 = vshrl.u32 %v785, 7
  %v787 = vsub.s32 0, %v786
  %v788 = vrot.slane %v783, %v787
  %790 = vmatprep.subr.mxu0 0.0
  %791 = vmatpush1.msra.mxu0 %v767
  %792 = vmatprep.subr.mxu0 0.0
  %793 = vmatpush1.msra.mxu0 %v768
  %794 = vmatprep.subr.mxu0 0.0
  %795 = vmatpush1.msra.mxu0 %v769
  %796 = vmatprep.subr.mxu0 0.0
  %797 = vmatpush1.msra.mxu0 %v770
  %798 = vmatprep.subr.mxu0 0.0
  %799 = vmatpush1.msra.mxu0 %v771
  %800 = vmatprep.subr.mxu0 0.0
  %801 = vmatpush1.msra.mxu0 %v772
  %802 = vmatprep.subr.mxu0 0.0
  %803 = vmatpush1.msra.mxu0 %v773
  %804 = vmatprep.subr.mxu0 0.0
  %805 = vmatpush1.msra.mxu0 %v774
  %806 = vmatprep.subr.mxu0 0.0
  %807 = vmatpush1.msra.mxu0 %v775
  %808 = vmatprep.subr.mxu0 0.0
  %809 = vmatpush1.msra.mxu0 %v776
  %810 = vmatprep.subr.mxu0 0.0
  %811 = vmatpush1.msra.mxu0 %v777
  %812 = vmatprep.subr.mxu0 0.0
  %813 = vmatpush1.msra.mxu0 %v778
  %814 = vmatprep.subr.mxu0 0.0
  %815 = vmatpush1.msra.mxu0 %v779
  %816 = vmatprep.subr.mxu0 0.0
  %817 = vmatpush1.msra.mxu0 %v780
  %818 = vmatprep.subr.mxu0 0.0
  %819 = vmatpush1.msra.mxu0 %v781
  %820 = vmatprep.subr.mxu0 0.0
  %821 = vmatpush1.msra.mxu0 %v782
  %822 = vmatprep.subr.mxu0 0.0
  %823 = vmatpush1.msra.mxu0 0.0
  %824 = vmatprep.subr.mxu0 0.0
  %825 = vmatpush1.msra.mxu0 0.0
  %826 = vmatprep.subr.mxu0 0.0
  %827 = vmatpush1.msra.mxu0 0.0
  %828 = vmatprep.subr.mxu0 0.0
  %829 = vmatpush1.msra.mxu0 0.0
  %830 = vmatprep.subr.mxu0 0.0
  %831 = vmatpush1.msra.mxu0 0.0
  %832 = vmatprep.subr.mxu0 0.0
  %833 = vmatpush1.msra.mxu0 0.0
  %834 = vmatprep.subr.mxu0 0.0
  %835 = vmatpush1.msra.mxu0 0.0
  %836 = vmatprep.subr.mxu0 0.0
  %837 = vmatpush1.msra.mxu0 0.0
  %838 = vmatprep.subr.mxu0 0.0
  %839 = vmatpush1.msra.mxu0 0.0
  %840 = vmatprep.subr.mxu0 0.0
  %841 = vmatpush1.msra.mxu0 0.0
  %842 = vmatprep.subr.mxu0 0.0
  %843 = vmatpush1.msra.mxu0 0.0
  %844 = vmatprep.subr.mxu0 0.0
  %845 = vmatpush1.msra.mxu0 0.0
  %846 = vmatprep.subr.mxu0 0.0
  %847 = vmatpush1.msra.mxu0 0.0
  %848 = vmatprep.subr.mxu0 0.0
  %849 = vmatpush1.msra.mxu0 0.0
  %850 = vmatprep.subr.mxu0 0.0
  %851 = vmatpush1.msra.mxu0 0.0
  %852 = vmatprep.subr.mxu0 0.0
  %853 = vmatpush1.msra.mxu0 0.0
  %854 = vmatprep.mubr.f32.mxu0 0.0
  %855 = vmatmul.mubr.f32.gmra.mrb[0].mxu0 %v766
  %v856 = vpop.f32.mrb[0].mxu0
  %v857 = vadd.f32 %v788, %v856
  %v858 = vpop.f32.mrb[0].mxu0
  %859 = vdwg.mxu0
  %860 = vst [vmem:[%s6] sm:$0xff] %v857
  // Predicated region
  $region26: #{recurrent_crossword_forward.1} parent=0 // pred_check
    _
  $region27: #{recurrent_crossword_forward.1} parent=0 // pred_check_branch
    %862 = sbr.rel (0) target = $region29
  $region28: #{recurrent_crossword_forward.1} parent=0 // pred_region
    _
  $region29: #{recurrent_crossword_forward.1} parent=0 // pred_fallthru
    _
  // Predicated region
  $region30: #{recurrent_crossword_forward.1} parent=0 // pred_check
    _
  $region31: #{recurrent_crossword_forward.1} parent=0 // pred_check_branch
    %864 = sbr.rel (0) target = $region33
  $region32: #{recurrent_crossword_forward.1} parent=0 // pred_region
    _
  $region33: #{recurrent_crossword_forward.1} parent=0 // pred_fallthru
    _

</llo_original>
